<compile_context>
chip_gen: v7x
topology: tpu7x:2x2x1
jax: 0.10.0
libtpu: 0.0.40
codegen_flags: <defaults>
</compile_context>

<pallas_src>
import functools

import jax
import jax.numpy as jnp
from jax.experimental import pallas as pl
from jax.experimental.pallas import tpu as pltpu


def _chamfer_kernel(x_ref, y_ref, out_ref, colmin_ref, *, ny_true, mask_tail):
    """One (batch b, preds-tile t) grid step.

    x_ref:      (1, D, Nx)   gts[b], transposed -> lane-dense along Nx
    y_ref:      (1, Nyt, D)  preds[b] tile t (coordinates as columns)
    out_ref:    (1, 1, 1)    per-batch loss accumulator (resident across t)
    colmin_ref: (1, Nx)      running min_j ||gts_i - preds_j||^2 per gts point
    """
    t = pl.program_id(1)
    n_t = pl.num_programs(1)

    @pl.when(t == 0)
    def _init():
        out_ref[...] = jnp.zeros(out_ref.shape, out_ref.dtype)
        colmin_ref[...] = jnp.full(colmin_ref.shape, jnp.inf, colmin_ref.dtype)

    x = x_ref[0].astype(jnp.float32)          # (D, Nx)
    y = y_ref[0].astype(jnp.float32)          # (Nyt, D)
    d_dim = x.shape[0]
    nyt = y.shape[0]

    # q[j, i] = ||gts[b, i] - preds[b, j]||^2  (== P[i, j], transposed),
    # built coordinate-wise on the VPU from (Nyt,1) - (1,Nx) outer differences.
    q = None
    for d in range(d_dim):
        diff = y[:, d:d + 1] - x[d:d + 1, :]   # (Nyt, Nx)
        q = diff * diff if q is None else q + diff * diff

    if mask_tail:
        # Zero-padded preds rows (beyond the true Ny) must not contribute.
        jj = jax.lax.broadcasted_iota(jnp.int32, (nyt, 1), 0) + t * nyt
        valid = jj < ny_true                   # (Nyt, 1)
        q = jnp.where(valid, q, jnp.inf)

    # loss_1 contribution: sum over preds points j of min over gts points i.
    row_min = jnp.min(q, axis=1, keepdims=True)          # (Nyt, 1)
    if mask_tail:
        row_min = jnp.where(valid, row_min, 0.0)
    loss1_part = jnp.sum(row_min)

    # loss_2: running min over preds points for every gts point i.
    col_min = jnp.min(q, axis=0, keepdims=True)           # (1, Nx)
    colmin_ref[...] = jnp.minimum(colmin_ref[...], col_min)

    out_ref[...] += jnp.reshape(loss1_part, (1, 1, 1))

    @pl.when(t == n_t - 1)
    def _finalize():
        out_ref[...] += jnp.reshape(jnp.sum(colmin_ref[...]), (1, 1, 1))


def _pick_ny_tile(n_y, n_x):
    # Bound the (Nyt, Nx) f32 distance tile to roughly <= 2 MiB of VMEM.
    budget_elems = (2 * 1024 * 1024) // 4
    nyt = budget_elems // max(n_x, 1)
    nyt = max(8, min(512, nyt))
    return max(8, nyt - nyt % 8)


def chamfer_loss(preds, gts, *, ny_tile=None):
    """preds: (B, Ny, D), gts: (B, Nx, D) -> scalar float32 chamfer loss."""
    b, n_y, d = preds.shape
    b2, n_x, d2 = gts.shape
    assert b == b2 and d == d2

    # Lane-dense layout for the resident gts operand: (B, D, Nx).
    gts_t = jnp.transpose(gts, (0, 2, 1))

    nyt = ny_tile if ny_tile is not None else _pick_ny_tile(n_y, n_x)
    if n_y <= nyt:
        nyt = n_y              # single full-extent tile, no (8,128) constraint
        n_t = 1
        ny_pad = n_y
    else:
        assert nyt % 8 == 0, "preds tile must be a multiple of 8"
        n_t = pl.cdiv(n_y, nyt)
        ny_pad = n_t * nyt
    mask_tail = ny_pad != n_y
    preds_p = preds
    if mask_tail:
        preds_p = jnp.pad(preds, ((0, 0), (0, ny_pad - n_y), (0, 0)))

    kernel = functools.partial(_chamfer_kernel, ny_true=n_y, mask_tail=mask_tail)

    per_batch = pl.pallas_call(
        kernel,
        out_shape=jax.ShapeDtypeStruct((b, 1, 1), jnp.float32),
        grid_spec=pltpu.PrefetchScalarGridSpec(
            num_scalar_prefetch=0,
            grid=(b, n_t),
            in_specs=[
                pl.BlockSpec((1, d, n_x), lambda bi, ti: (bi, 0, 0)),   # gts^T
                pl.BlockSpec((1, nyt, d), lambda bi, ti: (bi, ti, 0)),  # preds
            ],
            out_specs=pl.BlockSpec((1, 1, 1), lambda bi, ti: (bi, 0, 0)),
            scratch_shapes=[pltpu.VMEM((1, n_x), jnp.float32)],
        ),
        compiler_params=pltpu.CompilerParams(
            # Per-batch output blocks -> batch axis is independently writable
            # ("parallel", lets megacore shard it on v7x); the preds-tile axis
            # accumulates into the resident output block -> "arbitrary".
            dimension_semantics=("parallel", "arbitrary"),
        ),
    )(gts_t, preds_p)
    return jnp.sum(per_batch)


def _chamfer_loss_ref(preds, gts):
    # Pure-JAX reference matching the PyTorch module exactly (expansion form).
    x, y = gts.astype(jnp.float32), preds.astype(jnp.float32)
    rx = jnp.sum(x * x, axis=-1)[:, :, None]          # (B, Nx, 1)
    ry = jnp.sum(y * y, axis=-1)[:, None, :]          # (B, 1, Ny)
    zz = jnp.einsum("bid,bjd->bij", x, y)             # (B, Nx, Ny)
    p = rx + ry - 2.0 * zz
    return jnp.sum(jnp.min(p, axis=1)) + jnp.sum(jnp.min(p, axis=2))


if __name__ == "__main__":
    key = jax.random.PRNGKey(0)
    k1, k2, k3, k4 = jax.random.split(key, 4)

    # Case 1: small clouds, single preds tile per batch element.
    preds = jax.random.normal(k1, (2, 64, 3), dtype=jnp.float32)
    gts = jax.random.normal(k2, (2, 48, 3), dtype=jnp.float32)
    loss = jax.block_until_ready(chamfer_loss(preds, gts))
    ref = jax.block_until_ready(_chamfer_loss_ref(preds, gts))
    assert jnp.allclose(loss, ref, rtol=1e-3, atol=1e-3), (loss, ref)

    # Case 2: forces Ny tiling + tail masking (Ny=72, 16-point tiles) and a
    # lane-unaligned Nx, exercising the running-min accumulator path.
    preds2 = jax.random.normal(k3, (2, 72, 3), dtype=jnp.float32)
    gts2 = jax.random.normal(k4, (2, 50, 3), dtype=jnp.float32)
    loss2 = jax.block_until_ready(chamfer_loss(preds2, gts2, ny_tile=16))
    ref2 = jax.block_until_ready(_chamfer_loss_ref(preds2, gts2))
    assert jnp.allclose(loss2, ref2, rtol=1e-3, atol=1e-3), (loss2, ref2)

    print("KERNEL_OK")
</pallas_src>

<mosaic_0001>
module attributes {stable_mosaic.version = 11 : i64} {
  func.func @_chamfer_kernel(%arg0: i32, %arg1: i32, %arg2: memref<1x3x48xf32, #tpu.memory_space<vmem>>, %arg3: memref<1x64x3xf32, #tpu.memory_space<vmem>>, %arg4: memref<1x1x1xf32, #tpu.memory_space<vmem>>, %arg5: memref<1x48xf32, #tpu.memory_space<vmem>>) attributes {dimension_semantics = [#tpu.dimension_semantics<parallel>, #tpu.dimension_semantics<arbitrary>], iteration_bounds = array<i64: 2, 1>, scalar_prefetch = 0 : i64, scratch_operands = 1 : i64, tpu.core_type = #tpu.core_type<tc>, window_params = [{transform_indices = @transform_0, window_bounds = array<i64: 1, 3, 48>}, {transform_indices = @transform_1, window_bounds = array<i64: 1, 64, 3>}, {transform_indices = @transform_2, window_bounds = array<i64: 1, 1, 1>}]} {
    %c0_i32 = arith.constant 0 : i32
    %0 = arith.cmpi eq, %arg1, %c0_i32 : i32
    %1 = arith.extui %0 : i1 to i32
    %c0_i32_0 = arith.constant 0 : i32
    %2 = arith.cmpi ne, %1, %c0_i32_0 : i32
    scf.if %2 {
      %cst_20 = arith.constant 0.000000e+00 : f32
      %45 = vector.broadcast %cst_20 : f32 to vector<1x1x1xf32>
      %c0_21 = arith.constant 0 : index
      %c0_22 = arith.constant 0 : index
      %c0_23 = arith.constant 0 : index
      %46 = vector.load %arg4[%c0_21, %c0_22, %c0_23] : memref<1x1x1xf32, #tpu.memory_space<vmem>>, vector<1x1x1xf32>
      tpu.vector_store %arg4[%c0_21, %c0_22, %c0_23], %45 {strides = array<i32>} : memref<1x1x1xf32, #tpu.memory_space<vmem>>, vector<1x1x1xf32>,
      %cst_24 = arith.constant 0x7F800000 : f32
      %47 = vector.broadcast %cst_24 : f32 to vector<1x48xf32>
      %c0_25 = arith.constant 0 : index
      %c0_26 = arith.constant 0 : index
      %48 = vector.load %arg5[%c0_25, %c0_26] : memref<1x48xf32, #tpu.memory_space<vmem>>, vector<1x48xf32>
      tpu.vector_store %arg5[%c0_25, %c0_26], %47 {strides = array<i32>} : memref<1x48xf32, #tpu.memory_space<vmem>>, vector<1x48xf32>,
    } else {
    }
    %c0 = arith.constant 0 : index
    %c0_1 = arith.constant 0 : index
    %c0_2 = arith.constant 0 : index
    %3 = vector.load %arg2[%c0, %c0_1, %c0_2] : memref<1x3x48xf32, #tpu.memory_space<vmem>>, vector<1x3x48xf32>
    %4 = vector.shape_cast %3 : vector<1x3x48xf32> to vector<3x48xf32>
    %c0_3 = arith.constant 0 : index
    %c0_4 = arith.constant 0 : index
    %c0_5 = arith.constant 0 : index
    %5 = vector.load %arg3[%c0_3, %c0_4, %c0_5] : memref<1x64x3xf32, #tpu.memory_space<vmem>>, vector<1x64x3xf32>
    %6 = vector.shape_cast %5 : vector<1x64x3xf32> to vector<64x3xf32>
    %7 = vector.extract_strided_slice %6 {offsets = [0, 0], sizes = [64, 1], strides = [1, 1]} : vector<64x3xf32> to vector<64x1xf32>
    %8 = vector.extract_strided_slice %4 {offsets = [0, 0], sizes = [1, 48], strides = [1, 1]} : vector<3x48xf32> to vector<1x48xf32>
    %9 = vector.broadcast %7 : vector<64x1xf32> to vector<64x48xf32>
    %10 = vector.broadcast %8 : vector<1x48xf32> to vector<64x48xf32>
    %11 = arith.subf %9, %10 : vector<64x48xf32>
    %12 = arith.mulf %11, %11 : vector<64x48xf32>
    %13 = vector.extract_strided_slice %6 {offsets = [0, 1], sizes = [64, 1], strides = [1, 1]} : vector<64x3xf32> to vector<64x1xf32>
    %14 = vector.extract_strided_slice %4 {offsets = [1, 0], sizes = [1, 48], strides = [1, 1]} : vector<3x48xf32> to vector<1x48xf32>
    %15 = vector.broadcast %13 : vector<64x1xf32> to vector<64x48xf32>
    %16 = vector.broadcast %14 : vector<1x48xf32> to vector<64x48xf32>
    %17 = arith.subf %15, %16 : vector<64x48xf32>
    %18 = arith.mulf %17, %17 : vector<64x48xf32>
    %19 = arith.addf %12, %18 : vector<64x48xf32>
    %20 = vector.extract_strided_slice %6 {offsets = [0, 2], sizes = [64, 1], strides = [1, 1]} : vector<64x3xf32> to vector<64x1xf32>
    %21 = vector.extract_strided_slice %4 {offsets = [2, 0], sizes = [1, 48], strides = [1, 1]} : vector<3x48xf32> to vector<1x48xf32>
    %22 = vector.broadcast %20 : vector<64x1xf32> to vector<64x48xf32>
    %23 = vector.broadcast %21 : vector<1x48xf32> to vector<64x48xf32>
    %24 = arith.subf %22, %23 : vector<64x48xf32>
    %25 = arith.mulf %24, %24 : vector<64x48xf32>
    %26 = arith.addf %19, %25 : vector<64x48xf32>
    %cst = arith.constant dense<0x7F800000> : vector<64xf32>
    %27 = vector.multi_reduction <minimumf>, %26, %cst [1] : vector<64x48xf32> to vector<64xf32>
    %28 = vector.shape_cast %27 : vector<64xf32> to vector<64x1xf32>
    %29 = vector.shape_cast %28 : vector<64x1xf32> to vector<1x64x1xf32>
    %cst_6 = arith.constant dense<0.000000e+00> : vector<1xf32>
    %30 = vector.multi_reduction <add>, %29, %cst_6 [1, 2] : vector<1x64x1xf32> to vector<1xf32>
    %31 = vector.shape_cast %30 : vector<1xf32> to vector<1x1x1xf32>
    %32 = vector.extract %31[0, 0, 0] : f32 from vector<1x1x1xf32>
    %cst_7 = arith.constant dense<0x7F800000> : vector<48xf32>
    %33 = vector.multi_reduction <minimumf>, %26, %cst_7 [0] : vector<64x48xf32> to vector<48xf32>
    %34 = vector.shape_cast %33 : vector<48xf32> to vector<1x48xf32>
    %c0_8 = arith.constant 0 : index
    %c0_9 = arith.constant 0 : index
    %35 = vector.load %arg5[%c0_8, %c0_9] : memref<1x48xf32, #tpu.memory_space<vmem>>, vector<1x48xf32>
    %36 = arith.minimumf %35, %34 : vector<1x48xf32>
    %c0_10 = arith.constant 0 : index
    %c0_11 = arith.constant 0 : index
    %37 = vector.load %arg5[%c0_10, %c0_11] : memref<1x48xf32, #tpu.memory_space<vmem>>, vector<1x48xf32>
    tpu.vector_store %arg5[%c0_10, %c0_11], %36 {strides = array<i32>} : memref<1x48xf32, #tpu.memory_space<vmem>>, vector<1x48xf32>,
    %c0_12 = arith.constant 0 : index
    %c0_13 = arith.constant 0 : index
    %c0_14 = arith.constant 0 : index
    %38 = vector.load %arg4[%c0_12, %c0_13, %c0_14] : memref<1x1x1xf32, #tpu.memory_space<vmem>>, vector<1x1x1xf32>
    %39 = vector.broadcast %32 : f32 to vector<1x1x1xf32>
    %40 = arith.addf %38, %39 : vector<1x1x1xf32>
    %c0_15 = arith.constant 0 : index
    %c0_16 = arith.constant 0 : index
    %c0_17 = arith.constant 0 : index
    %41 = vector.load %arg4[%c0_15, %c0_16, %c0_17] : memref<1x1x1xf32, #tpu.memory_space<vmem>>, vector<1x1x1xf32>
    tpu.vector_store %arg4[%c0_15, %c0_16, %c0_17], %40 {strides = array<i32>} : memref<1x1x1xf32, #tpu.memory_space<vmem>>, vector<1x1x1xf32>,
    %c0_i32_18 = arith.constant 0 : i32
    %42 = arith.cmpi eq, %arg1, %c0_i32_18 : i32
    %43 = arith.extui %42 : i1 to i32
    %c0_i32_19 = arith.constant 0 : i32
    %44 = arith.cmpi ne, %43, %c0_i32_19 : i32
    scf.if %44 {
      %c0_20 = arith.constant 0 : index
      %c0_21 = arith.constant 0 : index
      %c0_22 = arith.constant 0 : index
      %45 = vector.load %arg4[%c0_20, %c0_21, %c0_22] : memref<1x1x1xf32, #tpu.memory_space<vmem>>, vector<1x1x1xf32>
      %c0_23 = arith.constant 0 : index
      %c0_24 = arith.constant 0 : index
      %46 = vector.load %arg5[%c0_23, %c0_24] : memref<1x48xf32, #tpu.memory_space<vmem>>, vector<1x48xf32>
      %47 = vector.shape_cast %46 : vector<1x48xf32> to vector<1x1x48xf32>
      %cst_25 = arith.constant dense<0.000000e+00> : vector<1xf32>
      %48 = vector.multi_reduction <add>, %47, %cst_25 [1, 2] : vector<1x1x48xf32> to vector<1xf32>
      %49 = vector.shape_cast %48 : vector<1xf32> to vector<1x1x1xf32>
      %50 = vector.extract %49[0, 0, 0] : f32 from vector<1x1x1xf32>
      %51 = vector.broadcast %50 : f32 to vector<1x1x1xf32>
      %52 = arith.addf %45, %51 : vector<1x1x1xf32>
      %c0_26 = arith.constant 0 : index
      %c0_27 = arith.constant 0 : index
      %c0_28 = arith.constant 0 : index
      %53 = vector.load %arg4[%c0_26, %c0_27, %c0_28] : memref<1x1x1xf32, #tpu.memory_space<vmem>>, vector<1x1x1xf32>
      tpu.vector_store %arg4[%c0_26, %c0_27, %c0_28], %52 {strides = array<i32>} : memref<1x1x1xf32, #tpu.memory_space<vmem>>, vector<1x1x1xf32>,
    } else {
    }
    return
  }
  func.func @transform_0(%arg0: i32, %arg1: i32) -> (i32, i32, i32) {
    %c0_i32 = arith.constant 0 : i32
    %c0_i32_0 = arith.constant 0 : i32
    %c0_i32_1 = arith.constant 0 : i32
    return %arg0, %c0_i32, %c0_i32_0 : i32, i32, i32
  }
  func.func @transform_1(%arg0: i32, %arg1: i32) -> (i32, i32, i32) {
    %c0_i32 = arith.constant 0 : i32
    %c0_i32_0 = arith.constant 0 : i32
    return %arg0, %arg1, %c0_i32 : i32, i32, i32
  }
  func.func @transform_2(%arg0: i32, %arg1: i32) -> (i32, i32, i32) {
    %c0_i32 = arith.constant 0 : i32
    %c0_i32_0 = arith.constant 0 : i32
    %c0_i32_1 = arith.constant 0 : i32
    return %arg0, %c0_i32, %c0_i32_0 : i32, i32, i32
  }
}

</mosaic_0001>

<llo_original>
// kernel: tpu_custom_call.1
$region0: #{tpu_custom_call.1}
  #allocation0 [shape = 'u32[]', space=smem, size = 0x4, offset = 0x4, fixed_abs, tag = 'smem constant byte address 0x4 - core index']
  #allocation1 [shape = 'u32[144,128]{1,0:T(1,128)}', space=vmem, size = 0x12000, scoped, tag = 'internal scratch']
  #allocation2 [shape = 'f32[1,48]{1,0:T(1,128)}', space=vmem, size = 0x200, scoped, tag = 'scratch operand']
  %s0 = inlined_call_operand.vmem [shape: f32[2,3,48], index: 0, kind: input, shape index: {}]
  %s1 = inlined_call_operand.vmem [shape: f32[2,64,3], index: 1, kind: input, shape index: {}]
  %s2 = inlined_call_operand.vmem [shape: f32[2,1,1], index: 2, kind: output, shape index: {}]
  %s3 = sld [smem:[#allocation0]]
  $region49: #{tpu_custom_call.1} parent=0
    _
  %s5 = ssub.s32 1, %s3
  %s6 = scalar_select 0, %s5, %s3
  loop: start=0, step=1, limit=4
  $region2: #{tpu_custom_call.1} parent=0 // loop_pre_header
    _
  $region3: #{tpu_custom_call.1} parent=0 // loop_header
    %s8 = sphi 0, %s12
    %p9 = scmp.ge.s32.totalorder %s8, 4
    %s15 = sphi 0, %s27
    %s16 = sphi 0, %s23
    %s17 = sphi 0, %s15
    %s18 = sphi 0, %s16
    %s19 = sphi 0, %s17
    %s20 = sphi 0, %s18
    %s30 = sphi 0, %s32
    %s33 = sphi 0, %s30
    %s34 = sphi 0, %s33
    %s50 = sphi 0, %s34
    %s58 = sphi 0, %s60
    %s61 = sphi 0, %s58
    %s62 = sphi 0, %s61
    %s78 = sphi 0, %s62
    %s84 = sphi 0, %s86
    %s87 = sphi 0, %s84
    %s88 = sphi 0, %s87
    %s104 = sphi 0, %s88
  $region4: #{tpu_custom_call.1} parent=0 // loop_header_branch
    %11 = sbr.rel (%p9) target = $region8
  $region5: #{tpu_custom_call.1} parent=0 // loop_body
    %s13 = ssub.s32 %s8, 1
    %s14 = ssub.s32 %s8, 2
    %s21 = sadd.s32 1, %s16
    %p22 = scmp.ge.s32.totalorder %s21, 1
    %s23 = scalar_select %p22, 0, %s21
    %s24 = sadd.s32 1, %s15
    %s25 = scalar_select %p22, %s24, %s15
    %p26 = scmp.ge.s32.totalorder %s25, 2
    %s27 = scalar_select %p26, 0, %s25
    %s28 = ssub.s32 %s15, %s27
    %p29 = scmp.eq.s32.totalorder %s28, 0
    %s31 = sadd.s32 %s30, 1
    %s32 = scalar_select %p29, %s30, %s31
    %p35 = pneg %p29
    %p36 = scmp.eq.s32.totalorder %s8, 1
    %p37 = por %p35, %p36
    %p38 = scmp.ne.s32.totalorder %s30, %s33
    %p39 = scmp.eq.s32.totalorder %s8, 0
    %p40 = por %p38, %p39
    %p41 = scmp.ne.s32.totalorder %s30, %s33
    %p42 = scmp.eq.s32.totalorder %s13, 1
    %p43 = por %p41, %p42
    %p44 = scmp.ne.s32.totalorder %s33, %s34
    %p45 = scmp.eq.s32.totalorder %s13, 0
    %p46 = por %p44, %p45
    %p47 = scmp.ne.s32.totalorder %s33, %s34
    %p48 = scmp.eq.s32.totalorder %s14, 1
    %p49 = por %p47, %p48
    %p51 = scmp.ne.s32.totalorder %s34, %s50
    %p52 = scmp.eq.s32.totalorder %s14, 0
    %p53 = por %p51, %p52
    %s54 = ssub.s32 %s15, %s27
    %s55 = ssub.s32 %s16, %s23
    %s56 = sor.u32 %s54, %s55
    %p57 = scmp.eq.s32.totalorder %s56, 0
    %s59 = sadd.s32 %s58, 1
    %s60 = scalar_select %p57, %s58, %s59
    %p63 = pneg %p57
    %p64 = scmp.eq.s32.totalorder %s8, 1
    %p65 = por %p63, %p64
    %p66 = scmp.ne.s32.totalorder %s58, %s61
    %p67 = scmp.eq.s32.totalorder %s8, 0
    %p68 = por %p66, %p67
    %p69 = scmp.ne.s32.totalorder %s58, %s61
    %p70 = scmp.eq.s32.totalorder %s13, 1
    %p71 = por %p69, %p70
    %p72 = scmp.ne.s32.totalorder %s61, %s62
    %p73 = scmp.eq.s32.totalorder %s13, 0
    %p74 = por %p72, %p73
    %p75 = scmp.ne.s32.totalorder %s61, %s62
    %p76 = scmp.eq.s32.totalorder %s14, 1
    %p77 = por %p75, %p76
    %p79 = scmp.ne.s32.totalorder %s62, %s78
    %p80 = scmp.eq.s32.totalorder %s14, 0
    %p81 = por %p79, %p80
    %s82 = ssub.s32 %s15, %s27
    %p83 = scmp.eq.s32.totalorder %s82, 0
    %s85 = sadd.s32 %s84, 1
    %s86 = scalar_select %p83, %s84, %s85
    %p89 = pneg %p83
    %p90 = scmp.eq.s32.totalorder %s8, 1
    %p91 = por %p89, %p90
    %p92 = scmp.ne.s32.totalorder %s84, %s87
    %p93 = scmp.eq.s32.totalorder %s8, 0
    %p94 = por %p92, %p93
    %p95 = scmp.ne.s32.totalorder %s84, %s87
    %p96 = scmp.eq.s32.totalorder %s13, 1
    %p97 = por %p95, %p96
    %p98 = scmp.ne.s32.totalorder %s87, %s88
    %p99 = scmp.eq.s32.totalorder %s13, 0
    %p100 = por %p98, %p99
    %p101 = scmp.ne.s32.totalorder %s87, %s88
    %p102 = scmp.eq.s32.totalorder %s14, 1
    %p103 = por %p101, %p102
    %p105 = scmp.ne.s32.totalorder %s88, %s104
    %p106 = scmp.eq.s32.totalorder %s14, 0
    %p107 = por %p105, %p106
    %p108 = scmp.le.s32.totalorder 1, %s8
    %p109 = scmp.lt.s32.totalorder %s8, 3
    %p110 = pnand %p108, %p109
    %p111 = pneg %p110
    // Predicated region
    $region9: #{tpu_custom_call.1} parent=5 // pred_check
      _
    $region10: #{tpu_custom_call.1} parent=5 // pred_check_branch
      %113 = sbr.rel (%p110) target = $region12
    $region11: #{tpu_custom_call.1} parent=5 // pred_region
      %s114 = ssub.s32 %s8, 1
    $region12: #{tpu_custom_call.1} parent=5 // pred_fallthru
      _
    %p115 = scmp.lt.s32.totalorder %s8, 2
    // Predicated region
    $region13: #{tpu_custom_call.1} parent=5 // pred_check
      %p116 = pneg %p115
    $region14: #{tpu_custom_call.1} parent=5 // pred_check_branch
      %118 = sbr.rel (%p116) target = $region16
    $region15: #{tpu_custom_call.1} parent=5 // pred_region
      // Predicated region
      $region17: #{tpu_custom_call.1} parent=15 // pred_check
        %p119 = pneg %p40
      $region18: #{tpu_custom_call.1} parent=15 // pred_check_branch
        %121 = sbr.rel (%p119) target = $region20
      $region19: #{tpu_custom_call.1} parent=15 // pred_region
        %p122 = scmp.lt.s32.totalorder %s15, 1
        %s123 = scalar_select %p122, %s15, 1
        %s124 = smul.addr %s123, 4
        %s125 = scalar_lea.vmem %s0, %s124
      $region20: #{tpu_custom_call.1} parent=15 // pred_fallthru
        _
      // Predicated region
      $region21: #{tpu_custom_call.1} parent=15 // pred_check
        %p126 = pneg %p68
      $region22: #{tpu_custom_call.1} parent=15 // pred_check_branch
        %128 = sbr.rel (%p126) target = $region24
      $region23: #{tpu_custom_call.1} parent=15 // pred_region
        %s129 = smul.u32 8, %s16
        %p130 = scmp.lt.s32.totalorder %s15, 1
        %s131 = scalar_select %p130, %s15, 1
        %p132 = scmp.lt.s32.totalorder %s129, 7
        %s133 = scalar_select %p132, %s129, 7
        %s134 = smul.addr %s131, 8
        %s135 = sadd.s32 %s133, %s134
        %s136 = smul.addr %s135, 8
        %s137 = scalar_lea.vmem %s1, %s136
        %s138 = smul.u32 8, %s16
      $region24: #{tpu_custom_call.1} parent=15 // pred_fallthru
        _
    $region16: #{tpu_custom_call.1} parent=5 // pred_fallthru
      _
    %p139 = scmp.le.s32.totalorder 1, %s8
    %p140 = scmp.lt.s32.totalorder %s8, 3
    %p141 = pnand %p139, %p140
    %p142 = pneg %p141
    // Predicated region
    $region25: #{tpu_custom_call.1} parent=5 // pred_check
      _
    $region26: #{tpu_custom_call.1} parent=5 // pred_check_branch
      %144 = sbr.rel (%p141) target = $region28
    $region27: #{tpu_custom_call.1} parent=5 // pred_region
      %s145 = ssub.s32 %s8, 1
      %p146 = scmp.lt.s32.totalorder %s17, 1
      %s147 = scalar_select %p146, %s17, 1
      %s148 = smul.addr %s147, 4
      %s149 = scalar_lea.vmem %s0, %s148
      %p150 = pneg %p46
      %p151 = pneg %p43
      %s152 = smul.u32 8, %s18
      %p153 = scmp.lt.s32.totalorder %s17, 1
      %s154 = scalar_select %p153, %s17, 1
      %p155 = scmp.lt.s32.totalorder %s152, 7
      %s156 = scalar_select %p155, %s152, 7
      %s157 = smul.addr %s154, 8
      %s158 = sadd.s32 %s156, %s157
      %s159 = smul.addr %s158, 8
      %s160 = scalar_lea.vmem %s1, %s159
      %p161 = pneg %p74
      %p162 = pneg %p71
      %p163 = pneg %p100
      %p164 = pneg %p97
      %p165 = scmp.lt.s32.totalorder %s17, 1
      %s166 = scalar_select %p165, %s17, 1
      %s167 = scalar_lea.vmem %s2, %s166
      %p168 = scmp.lt.s32.totalorder %s17, 1
      %s169 = scalar_select %p168, %s17, 1
      %s170 = smul.addr %s169, 4
      %s171 = scalar_lea.vmem %s0, %s170
      %s172 = smul.u32 8, %s18
      %p173 = scmp.lt.s32.totalorder %s17, 1
      %s174 = scalar_select %p173, %s17, 1
      %p175 = scmp.lt.s32.totalorder %s172, 7
      %s176 = scalar_select %p175, %s172, 7
      %s177 = smul.addr %s174, 8
      %s178 = sadd.s32 %s176, %s177
      %s179 = smul.addr %s178, 8
      %s180 = scalar_lea.vmem %s1, %s179
      %s181 = smul.u32 8, %s18
      %p182 = scmp.lt.s32.totalorder %s17, 1
      %s183 = scalar_select %p182, %s17, 1
      %s184 = scalar_lea.vmem %s2, %s183
      %p185 = scmp.eq.s32.totalorder %s18, 0
      // Predicated region
      $region29: #{tpu_custom_call.1} parent=27 // pred_check
        %p186 = pneg %p185
      $region30: #{tpu_custom_call.1} parent=27 // pred_check_branch
        %188 = sbr.rel (%p186) target = $region32
      $region31: #{tpu_custom_call.1} parent=27 // pred_region
        %vm189 = vcmask 0
        %190 = vst.msk [vmem:[%s184] sm:$0x1] %vm189, 0.0
        %vm191 = vcmask 385024
        %192 = vst.msk [vmem:[#allocation2] sm:$0x1] %vm191, inf
      $region32: #{tpu_custom_call.1} parent=27 // pred_fallthru
        _
      %v193 = vld [vmem:[%s171] sm:$0x7]
      %v194 = vld [vmem:[%s180] sm:$0xff]
      %v195 = vld [vmem:[%s180 + $0x8] sm:$0xff]
      %v196 = vld [vmem:[%s180 + $0x10] sm:$0xff]
      %v197 = vld [vmem:[%s180 + $0x18] sm:$0xff]
      %v198 = vld [vmem:[%s180 + $0x20] sm:$0xff]
      %v199 = vld [vmem:[%s180 + $0x28] sm:$0xff]
      %v200 = vld [vmem:[%s180 + $0x30] sm:$0xff]
      %v201 = vld [vmem:[%s180 + $0x38] sm:$0xff]
      %203 = vset.pattern.permute.xlu0 0
      %204 = vperm.xlu0 %203, %v194
      %v205 = vpop.permute.xlu0 %204
      %208 = vset.pattern.permute.xlu0 0
      %209 = vperm.xlu0 %208, %v195
      %v210 = vpop.permute.xlu0 %209
      %213 = vset.pattern.permute.xlu0 0
      %214 = vperm.xlu0 %213, %v196
      %v215 = vpop.permute.xlu0 %214
      %218 = vset.pattern.permute.xlu0 0
      %219 = vperm.xlu0 %218, %v197
      %v220 = vpop.permute.xlu0 %219
      %223 = vset.pattern.permute.xlu0 0
      %224 = vperm.xlu0 %223, %v198
      %v225 = vpop.permute.xlu0 %224
      %228 = vset.pattern.permute.xlu0 0
      %229 = vperm.xlu0 %228, %v199
      %v230 = vpop.permute.xlu0 %229
      %233 = vset.pattern.permute.xlu0 0
      %234 = vperm.xlu0 %233, %v200
      %v235 = vpop.permute.xlu0 %234
      %238 = vset.pattern.permute.xlu0 0
      %239 = vperm.xlu0 %238, %v201
      %v240 = vpop.permute.xlu0 %239
      %v242 = vlaneseq
      %v243 = vshrl.u32 %v242, 7
      %v244 = vsub.s32 0, %v243
      %v245 = vrot.slane %v193, %v244
      %v246 = vsub.f32 %v205, %v245
      %v247 = vsub.f32 %v210, %v245
      %v248 = vsub.f32 %v215, %v245
      %v249 = vsub.f32 %v220, %v245
      %v250 = vsub.f32 %v225, %v245
      %v251 = vsub.f32 %v230, %v245
      %v252 = vsub.f32 %v235, %v245
      %v253 = vsub.f32 %v240, %v245
      %v254 = vmul.f32 %v246, %v246
      %v255 = vmul.f32 %v247, %v247
      %v256 = vmul.f32 %v248, %v248
      %v257 = vmul.f32 %v249, %v249
      %v258 = vmul.f32 %v250, %v250
      %v259 = vmul.f32 %v251, %v251
      %v260 = vmul.f32 %v252, %v252
      %v261 = vmul.f32 %v253, %v253
      %262 = vset.pattern.permute.xlu0 1
      %263 = vperm.xlu0 %262, %v194
      %v264 = vpop.permute.xlu0 %263
      %266 = vset.pattern.permute.xlu0 1
      %267 = vperm.xlu0 %266, %v195
      %v268 = vpop.permute.xlu0 %267
      %270 = vset.pattern.permute.xlu0 1
      %271 = vperm.xlu0 %270, %v196
      %v272 = vpop.permute.xlu0 %271
      %274 = vset.pattern.permute.xlu0 1
      %275 = vperm.xlu0 %274, %v197
      %v276 = vpop.permute.xlu0 %275
      %278 = vset.pattern.permute.xlu0 1
      %279 = vperm.xlu0 %278, %v198
      %v280 = vpop.permute.xlu0 %279
      %282 = vset.pattern.permute.xlu0 1
      %283 = vperm.xlu0 %282, %v199
      %v284 = vpop.permute.xlu0 %283
      %286 = vset.pattern.permute.xlu0 1
      %287 = vperm.xlu0 %286, %v200
      %v288 = vpop.permute.xlu0 %287
      %290 = vset.pattern.permute.xlu0 1
      %291 = vperm.xlu0 %290, %v201
      %v292 = vpop.permute.xlu0 %291
      %v294 = vlaneseq
      %v295 = vshrl.u32 %v294, 7
      %v296 = vsub.s32 1, %v295
      %v297 = vrot.slane %v193, %v296
      %v298 = vsub.f32 %v264, %v297
      %v299 = vsub.f32 %v268, %v297
      %v300 = vsub.f32 %v272, %v297
      %v301 = vsub.f32 %v276, %v297
      %v302 = vsub.f32 %v280, %v297
      %v303 = vsub.f32 %v284, %v297
      %v304 = vsub.f32 %v288, %v297
      %v305 = vsub.f32 %v292, %v297
      %v306 = vmul.f32 %v298, %v298
      %v307 = vmul.f32 %v299, %v299
      %v308 = vmul.f32 %v300, %v300
      %v309 = vmul.f32 %v301, %v301
      %v310 = vmul.f32 %v302, %v302
      %v311 = vmul.f32 %v303, %v303
      %v312 = vmul.f32 %v304, %v304
      %v313 = vmul.f32 %v305, %v305
      %v314 = vadd.f32 %v254, %v306
      %v315 = vadd.f32 %v255, %v307
      %v316 = vadd.f32 %v256, %v308
      %v317 = vadd.f32 %v257, %v309
      %v318 = vadd.f32 %v258, %v310
      %v319 = vadd.f32 %v259, %v311
      %v320 = vadd.f32 %v260, %v312
      %v321 = vadd.f32 %v261, %v313
      %322 = vset.pattern.permute.xlu0 2
      %323 = vperm.xlu0 %322, %v194
      %v324 = vpop.permute.xlu0 %323
      %326 = vset.pattern.permute.xlu0 2
      %327 = vperm.xlu0 %326, %v195
      %v328 = vpop.permute.xlu0 %327
      %330 = vset.pattern.permute.xlu0 2
      %331 = vperm.xlu0 %330, %v196
      %v332 = vpop.permute.xlu0 %331
      %334 = vset.pattern.permute.xlu0 2
      %335 = vperm.xlu0 %334, %v197
      %v336 = vpop.permute.xlu0 %335
      %338 = vset.pattern.permute.xlu0 2
      %339 = vperm.xlu0 %338, %v198
      %v340 = vpop.permute.xlu0 %339
      %342 = vset.pattern.permute.xlu0 2
      %343 = vperm.xlu0 %342, %v199
      %v344 = vpop.permute.xlu0 %343
      %346 = vset.pattern.permute.xlu0 2
      %347 = vperm.xlu0 %346, %v200
      %v348 = vpop.permute.xlu0 %347
      %350 = vset.pattern.permute.xlu0 2
      %351 = vperm.xlu0 %350, %v201
      %v352 = vpop.permute.xlu0 %351
      %v354 = vlaneseq
      %v355 = vshrl.u32 %v354, 7
      %v356 = vsub.s32 2, %v355
      %v357 = vrot.slane %v193, %v356
      %v358 = vsub.f32 %v324, %v357
      %v359 = vsub.f32 %v328, %v357
      %v360 = vsub.f32 %v332, %v357
      %v361 = vsub.f32 %v336, %v357
      %v362 = vsub.f32 %v340, %v357
      %v363 = vsub.f32 %v344, %v357
      %v364 = vsub.f32 %v348, %v357
      %v365 = vsub.f32 %v352, %v357
      %v366 = vmul.f32 %v358, %v358
      %v367 = vmul.f32 %v359, %v359
      %v368 = vmul.f32 %v360, %v360
      %v369 = vmul.f32 %v361, %v361
      %v370 = vmul.f32 %v362, %v362
      %v371 = vmul.f32 %v363, %v363
      %v372 = vmul.f32 %v364, %v364
      %v373 = vmul.f32 %v365, %v365
      %v374 = vadd.f32 %v314, %v366
      %v375 = vadd.f32 %v315, %v367
      %v376 = vadd.f32 %v316, %v368
      %v377 = vadd.f32 %v317, %v369
      %v378 = vadd.f32 %v318, %v370
      %v379 = vadd.f32 %v319, %v371
      %v380 = vadd.f32 %v320, %v372
      %v381 = vadd.f32 %v321, %v373
      %vm382 = vcmask 392192
      %v383 = vsel %vm382, %v374, inf
      %384 = vmin.xlane.f32.xlu0 %v383
      %v385 = vpop.xlane.xlu0 %384
      %v386 = vsel %vm382, %v375, inf
      %387 = vmin.xlane.f32.xlu0 %v386
      %v388 = vpop.xlane.xlu0 %387
      %v389 = vsel %vm382, %v376, inf
      %390 = vmin.xlane.f32.xlu0 %v389
      %v391 = vpop.xlane.xlu0 %390
      %v392 = vsel %vm382, %v377, inf
      %393 = vmin.xlane.f32.xlu0 %v392
      %v394 = vpop.xlane.xlu0 %393
      %v395 = vsel %vm382, %v378, inf
      %396 = vmin.xlane.f32.xlu0 %v395
      %v397 = vpop.xlane.xlu0 %396
      %v398 = vsel %vm382, %v379, inf
      %399 = vmin.xlane.f32.xlu0 %v398
      %v400 = vpop.xlane.xlu0 %399
      %v401 = vsel %vm382, %v380, inf
      %402 = vmin.xlane.f32.xlu0 %v401
      %v403 = vpop.xlane.xlu0 %402
      %v404 = vsel %vm382, %v381, inf
      %405 = vmin.xlane.f32.xlu0 %v404
      %v406 = vpop.xlane.xlu0 %405
      %vm407 = vcmask 7168
      %v408 = vsel %vm407, %v385, 0.0
      %v409 = vsel %vm407, %v388, 0.0
      %v410 = vadd.f32 %v408, %v409
      %v411 = vsel %vm407, %v391, 0.0
      %v412 = vadd.f32 %v410, %v411
      %v413 = vsel %vm407, %v394, 0.0
      %v414 = vadd.f32 %v412, %v413
      %v415 = vsel %vm407, %v397, 0.0
      %v416 = vadd.f32 %v414, %v415
      %v417 = vsel %vm407, %v400, 0.0
      %v418 = vadd.f32 %v416, %v417
      %v419 = vsel %vm407, %v403, 0.0
      %v420 = vadd.f32 %v418, %v419
      %v421 = vsel %vm407, %v406, 0.0
      %v422 = vadd.f32 %v420, %v421
      %423 = vadd.xlane.f32.xlu0 %v422
      %v424 = vpop.xlane.xlu0 %423
      %v425 = vrot.slane %v424, 4
      %v426 = vadd.f32 %v424, %v425
      %v427 = vrot.slane %v426, 2
      %v428 = vadd.f32 %v426, %v427
      %v429 = vrot.slane %v428, 1
      %v430 = vadd.f32 %v428, %v429
      %s431 = vtos %v430
      %v432 = vmin.f32 %v383, %v395
      %v433 = vmin.f32 %v386, %v398
      %v434 = vmin.f32 %v389, %v401
      %v435 = vmin.f32 %v392, %v404
      %v436 = vmin.f32 %v432, %v433
      %v437 = vmin.f32 %v434, %v435
      %v438 = vmin.f32 %v436, %v437
      %v439 = vrot.slane %v438, 4
      %v440 = vmin.f32 %v438, %v439
      %v441 = vrot.slane %v440, 2
      %v442 = vmin.f32 %v440, %v441
      %v443 = vrot.slane %v442, 1
      %v444 = vmin.f32 %v442, %v443
      %v445 = vld [vmem:[#allocation2] sm:$0x1]
      %v446 = vmin.f32 %v445, %v444
      %vm447 = vcmask 385024
      %448 = vst.msk [vmem:[#allocation2] sm:$0x1] %vm447, %v446
      %v449 = vld [vmem:[%s184] sm:$0x1]
      %v450 = vstv %s431
      %v451 = vadd.f32 %v449, %v450
      %vm452 = vcmask 0
      %453 = vst.msk [vmem:[%s184] sm:$0x1] %vm452, %v451
      // Predicated region
      $region33: #{tpu_custom_call.1} parent=27 // pred_check
        %p454 = pneg %p185
      $region34: #{tpu_custom_call.1} parent=27 // pred_check_branch
        %456 = sbr.rel (%p454) target = $region36
      $region35: #{tpu_custom_call.1} parent=27 // pred_region
        %v457 = vld [vmem:[%s184] sm:$0x1]
        %v458 = vld [vmem:[#allocation2] sm:$0x1]
        %v459 = vsel %vm447, %v458, 0.0
        %460 = vadd.xlane.f32.xlu0 %v459
        %v461 = vpop.xlane.xlu0 %460
        %v462 = vrot.slane %v461, 4
        %v463 = vadd.f32 %v461, %v462
        %v464 = vrot.slane %v463, 2
        %v465 = vadd.f32 %v463, %v464
        %v466 = vrot.slane %v465, 1
        %v467 = vadd.f32 %v465, %v466
        %s468 = vtos %v467
        %v469 = vstv %s468
        %v470 = vadd.f32 %v457, %v469
        %471 = vst.msk [vmem:[%s184] sm:$0x1] %vm452, %v470
      $region36: #{tpu_custom_call.1} parent=27 // pred_fallthru
        _
      %p472 = scmp.lt.s32.totalorder %s17, 1
      %s473 = scalar_select %p472, %s17, 1
      %s474 = scalar_lea.vmem %s2, %s473
      // Predicated region
      $region37: #{tpu_custom_call.1} parent=27 // pred_check
        %p475 = pneg %p97
      $region38: #{tpu_custom_call.1} parent=27 // pred_check_branch
        %477 = sbr.rel (%p475) target = $region40
      $region39: #{tpu_custom_call.1} parent=27 // pred_region
        _
      $region40: #{tpu_custom_call.1} parent=27 // pred_fallthru
        _
    $region28: #{tpu_custom_call.1} parent=5 // pred_fallthru
      _
    %p478 = scmp.le.s32.totalorder 2, %s8
    // Predicated region
    $region41: #{tpu_custom_call.1} parent=5 // pred_check
      %p479 = pneg %p478
    $region42: #{tpu_custom_call.1} parent=5 // pred_check_branch
      %481 = sbr.rel (%p479) target = $region44
    $region43: #{tpu_custom_call.1} parent=5 // pred_region
      %s482 = ssub.s32 %s8, 2
      // Predicated region
      $region45: #{tpu_custom_call.1} parent=43 // pred_check
        %p483 = pneg %p103
      $region46: #{tpu_custom_call.1} parent=43 // pred_check_branch
        %485 = sbr.rel (%p483) target = $region48
      $region47: #{tpu_custom_call.1} parent=43 // pred_region
        %p486 = scmp.lt.s32.totalorder %s19, 1
        %s487 = scalar_select %p486, %s19, 1
        %s488 = scalar_lea.vmem %s2, %s487
      $region48: #{tpu_custom_call.1} parent=43 // pred_fallthru
        _
    $region44: #{tpu_custom_call.1} parent=5 // pred_fallthru
      _
  $region6: #{tpu_custom_call.1} parent=0 // loop_footer
    %s12 = sadd.s32 1, %s8
  $region7: #{tpu_custom_call.1} parent=0 // loop_footer_branch
    %7 = sbr.rel target = $region3
  $region8: #{tpu_custom_call.1} parent=0 // loop_exit
    _

</llo_original>
